<compile_context>
chip_gen: v6e
topology: v6e:2x2x1
jax: 0.10.0
libtpu: 0.0.40
codegen_flags: <defaults>
</compile_context>

<pallas_src>
import functools

import jax
import jax.numpy as jnp
from jax import lax
from jax.experimental import pallas as pl
from jax.experimental.pallas import tpu as pltpu


def _fr_kernel(rhs_ref, w_ref, o_ref):
    """Fused (conv0|conv1)+bias+BN contraction for one (batch, M-tile).

    rhs_ref: (K+1, TM)   channel-major activations; last row is all-ones
    w_ref:   (Cout, K+1) BN-scale-folded weights; last column is the shift
    o_ref:   (Cout, TM)
    """
    o_ref[...] = jnp.dot(
        w_ref[...], rhs_ref[...], preferred_element_type=jnp.float32
    ).astype(o_ref.dtype)


def _pick_m_tile(hw, max_tm=4096):
    """Largest lane tile <= max_tm: full HW if it fits, else a multiple of 128."""
    if hw <= max_tm:
        return hw
    tm = (max_tm // 128) * 128
    t = tm
    while t >= 128:
        if hw % t == 0:
            return t
        t -= 128
    return tm  # ragged last block; Pallas masks the edge stores


@functools.partial(jax.jit, static_argnames=("stride", "affine", "compute_dtype"))
def factorized_reduce_forward(x, params, *, stride, affine, eps=1e-5,
                              compute_dtype=jnp.float32):
    """Inference-mode forward of NB201 FactorizedReduce.

    x: (N, C_in, H, W) float32, NCHW (PyTorch layout).
    params:
      stride == 2: 'w0' (Co0, Cin, 1, 1), 'w1' (Co1, Cin, 1, 1)
                   (+ 'b0','b1' when affine=False, since conv bias = not affine)
      stride == 1: 'w' (Cout, Cin, 1, 1) (+ 'b' when affine=False)
      BatchNorm:   'bn_mean','bn_var' (Cout,), plus 'bn_gamma','bn_beta' if affine.
    """
    n, cin, h, w = x.shape
    x = x.astype(jnp.float32)

    if stride == 2:
        ho, wo = (h + 1) // 2, (w + 1) // 2
        # relu fused with the stride-2 gathers (relu commutes with the gather
        # and with zero-padding); relu happens before any bf16 cast (v5e VPU).
        x00 = jnp.maximum(x[:, :, ::2, ::2], 0.0)           # (N, Cin, Ho, Wo)
        x11 = jnp.maximum(x[:, :, 1::2, 1::2], 0.0)         # branch-1 samples
        # Zero-fill only the last row/col of the downsampled slice when H or W
        # is odd (matches ConstantPad2d((0,1,0,1)) + [:, :, 1:, 1:]); no
        # full-resolution pad copy.
        ph, pw = ho - x11.shape[2], wo - x11.shape[3]
        if ph or pw:
            x11 = jnp.pad(x11, ((0, 0), (0, 0), (0, ph), (0, pw)))
        ones = jnp.ones((n, 1, ho, wo), compute_dtype)
        # One jit-fused producer pass; channel-second layout -> no transposes.
        rhs = jnp.concatenate(
            [x00.astype(compute_dtype), x11.astype(compute_dtype), ones], axis=1
        ).reshape(n, 2 * cin + 1, ho * wo)

        w0 = params['w0'].reshape(-1, cin).astype(jnp.float32)
        w1 = params['w1'].reshape(-1, cin).astype(jnp.float32)
        co0, co1 = w0.shape[0], w1.shape[0]
        cout = co0 + co1
        # Block-diagonal stacking -> single MXU contraction over K = 2*Cin.
        w_full = jnp.zeros((cout, 2 * cin), jnp.float32)
        w_full = w_full.at[:co0, :cin].set(w0)
        w_full = w_full.at[co0:, cin:].set(w1)
        if affine:
            bias = jnp.zeros((cout,), jnp.float32)
        else:
            bias = jnp.concatenate([params['b0'], params['b1']]).astype(jnp.float32)
        out_h, out_w = ho, wo
    elif stride == 1:
        cout = params['w'].shape[0]
        ones = jnp.ones((n, 1, h, w), compute_dtype)
        rhs = jnp.concatenate([x.astype(compute_dtype), ones], axis=1
                              ).reshape(n, cin + 1, h * w)
        w_full = params['w'].reshape(cout, cin).astype(jnp.float32)
        bias = (jnp.zeros((cout,), jnp.float32) if affine
                else params['b'].astype(jnp.float32))
        out_h, out_w = h, w
    else:
        raise ValueError('Invalid stride : {:}'.format(stride))

    # Fold inference-mode BatchNorm: scale into the weights; bias+shift into the
    # extra weight column (matched by the all-ones rhs row).
    gamma = params['bn_gamma'] if affine else jnp.ones((cout,), jnp.float32)
    beta = params['bn_beta'] if affine else jnp.zeros((cout,), jnp.float32)
    s = gamma * lax.rsqrt(params['bn_var'].astype(jnp.float32) + eps)     # (Cout,)
    w_eff = w_full * s[:, None]                                           # (Cout, K)
    shift = (bias - params['bn_mean'].astype(jnp.float32)) * s + beta     # (Cout,)
    w_aug = jnp.concatenate([w_eff, shift[:, None]], axis=1).astype(compute_dtype)

    k_aug = rhs.shape[1]
    hw = rhs.shape[2]
    tm = _pick_m_tile(hw)
    grid = (n, pl.cdiv(hw, tm))

    cost = pl.CostEstimate(
        flops=2 * cout * k_aug * n * hw,
        transcendentals=0,
        bytes_accessed=(n * k_aug * hw + cout * k_aug)
        * jnp.dtype(compute_dtype).itemsize
        + n * cout * hw * 4,
    )

    out = pl.pallas_call(
        _fr_kernel,
        out_shape=jax.ShapeDtypeStruct((n, cout, hw), jnp.float32),
        grid=grid,
        in_specs=[
            pl.BlockSpec((None, k_aug, tm), lambda b, m: (b, 0, m)),   # rhs tile
            pl.BlockSpec((cout, k_aug), lambda b, m: (0, 0)),          # weights (resident)
        ],
        out_specs=pl.BlockSpec((None, cout, tm), lambda b, m: (b, 0, m)),
        compiler_params=pltpu.CompilerParams(
            dimension_semantics=("parallel", "parallel")),
        cost_estimate=cost,
    )(rhs, w_aug)

    # (N, Cout, Ho*Wo) -> (N, Cout, Ho, Wo): free reshape, no transpose.
    return out.reshape(n, cout, out_h, out_w)


def _reference(x, params, *, stride, affine, eps=1e-5):
    """Pure-JAX reference of FactorizedReduce.forward (inference-mode BN)."""
    dn = ("NCHW", "OIHW", "NCHW")
    if stride == 2:
        xr = jax.nn.relu(x)
        y0 = lax.conv_general_dilated(xr, params['w0'], (2, 2), 'VALID',
                                      dimension_numbers=dn)
        y_shift = jnp.pad(xr, ((0, 0), (0, 0), (0, 1), (0, 1)))[:, :, 1:, 1:]
        y1 = lax.conv_general_dilated(y_shift, params['w1'], (2, 2), 'VALID',
                                      dimension_numbers=dn)
        if not affine:
            y0 = y0 + params['b0'][None, :, None, None]
            y1 = y1 + params['b1'][None, :, None, None]
        out = jnp.concatenate([y0, y1], axis=1)
    else:
        out = lax.conv_general_dilated(x, params['w'], (1, 1), 'VALID',
                                       dimension_numbers=dn)
        if not affine:
            out = out + params['b'][None, :, None, None]
    cout = out.shape[1]
    gamma = params['bn_gamma'] if affine else jnp.ones((cout,), jnp.float32)
    beta = params['bn_beta'] if affine else jnp.zeros((cout,), jnp.float32)
    inv = lax.rsqrt(params['bn_var'] + eps)
    return ((out - params['bn_mean'][None, :, None, None])
            * (gamma * inv)[None, :, None, None]
            + beta[None, :, None, None])


if __name__ == "__main__":
    key = jax.random.PRNGKey(0)
    keys = jax.random.split(key, 14)

    # Cout a multiple of 8 so the (Cout, TM) stores are sublane-unmasked.
    N, CIN, COUT, H, W = 2, 4, 8, 16, 16
    co0, co1 = COUT // 2, COUT - COUT // 2

    x = jax.random.normal(keys[0], (N, CIN, H, W), dtype=jnp.float32)

    bn_common = dict(
        bn_gamma=1.0 + 0.1 * jax.random.normal(keys[3], (COUT,), dtype=jnp.float32),
        bn_beta=0.1 * jax.random.normal(keys[4], (COUT,), dtype=jnp.float32),
        bn_mean=0.05 * jax.random.normal(keys[5], (COUT,), dtype=jnp.float32),
        bn_var=jnp.abs(jax.random.normal(keys[6], (COUT,), dtype=jnp.float32)) + 0.5,
    )

    # --- stride == 2, affine=True (the "factorized reduce" path) ---
    params2 = dict(
        w0=0.3 * jax.random.normal(keys[1], (co0, CIN, 1, 1), dtype=jnp.float32),
        w1=0.3 * jax.random.normal(keys[2], (co1, CIN, 1, 1), dtype=jnp.float32),
        **bn_common,
    )
    y2 = jax.block_until_ready(
        factorized_reduce_forward(x, params2, stride=2, affine=True))
    y2_ref = _reference(x, params2, stride=2, affine=True)
    assert y2.shape == (N, COUT, H // 2, W // 2), y2.shape
    err2 = float(jnp.max(jnp.abs(y2 - y2_ref)))
    assert jnp.allclose(y2, y2_ref, atol=1e-4, rtol=1e-4), err2

    # --- stride == 1 (plain 1x1 conv + BN, no ReLU) ---
    params1 = dict(
        w=0.3 * jax.random.normal(keys[7], (COUT, CIN, 1, 1), dtype=jnp.float32),
        **bn_common,
    )
    y1 = jax.block_until_ready(
        factorized_reduce_forward(x, params1, stride=1, affine=True))
    y1_ref = _reference(x, params1, stride=1, affine=True)
    assert y1.shape == (N, COUT, H, W), y1.shape
    err1 = float(jnp.max(jnp.abs(y1 - y1_ref)))
    assert jnp.allclose(y1, y1_ref, atol=1e-4, rtol=1e-4), err1

    # --- stride == 2, affine=False (conv biases), odd H/W: exercises the
    #     edge zero-fill that replaced the full-tensor pad, and the bias fold ---
    HO, WO = 15, 15
    x_odd = jax.random.normal(keys[8], (N, CIN, HO, WO), dtype=jnp.float32)
    params_odd = dict(
        w0=0.3 * jax.random.normal(keys[9], (co0, CIN, 1, 1), dtype=jnp.float32),
        w1=0.3 * jax.random.normal(keys[10], (co1, CIN, 1, 1), dtype=jnp.float32),
        b0=0.1 * jax.random.normal(keys[11], (co0,), dtype=jnp.float32),
        b1=0.1 * jax.random.normal(keys[12], (co1,), dtype=jnp.float32),
        bn_mean=bn_common['bn_mean'],
        bn_var=bn_common['bn_var'],
    )
    y3 = jax.block_until_ready(
        factorized_reduce_forward(x_odd, params_odd, stride=2, affine=False))
    y3_ref = _reference(x_odd, params_odd, stride=2, affine=False)
    assert y3.shape == (N, COUT, (HO + 1) // 2, (WO + 1) // 2), y3.shape
    err3 = float(jnp.max(jnp.abs(y3 - y3_ref)))
    assert jnp.allclose(y3, y3_ref, atol=1e-4, rtol=1e-4), err3

    # --- bf16 activations/weights (v6e/v7x bandwidth lever), f32 accumulation ---
    y2_bf16 = jax.block_until_ready(
        factorized_reduce_forward(x, params2, stride=2, affine=True,
                                  compute_dtype=jnp.bfloat16))
    err_bf16 = float(jnp.max(jnp.abs(y2_bf16 - y2_ref)))
    assert err_bf16 < 1e-1, err_bf16

    print("KERNEL_OK")
</pallas_src>

<mosaic_0001>
module attributes {stable_mosaic.version = 11 : i64} {
  func.func @_fr_kernel(%arg0: i32, %arg1: i32, %arg2: memref<1x9x64xf32, #tpu.memory_space<vmem>>, %arg3: memref<8x9xf32, #tpu.memory_space<vmem>>, %arg4: memref<1x8x64xf32, #tpu.memory_space<vmem>>) attributes {dimension_semantics = [#tpu.dimension_semantics<parallel>, #tpu.dimension_semantics<parallel>], iteration_bounds = array<i64: 2, 1>, scalar_prefetch = 0 : i64, scratch_operands = 0 : i64, tpu.core_type = #tpu.core_type<tc>, window_params = [{transform_indices = @transform_0, window_bounds = array<i64: 1, 9, 64>}, {pipeline_mode = #tpu.pipeline_mode<synchronous>, transform_indices = @transform_1, window_bounds = array<i64: 8, 9>}, {transform_indices = @transform_2, window_bounds = array<i64: 1, 8, 64>}]} {
    %c0 = arith.constant 0 : index
    %c0_0 = arith.constant 0 : index
    %0 = vector.load %arg3[%c0, %c0_0] : memref<8x9xf32, #tpu.memory_space<vmem>>, vector<8x9xf32>
    %c0_1 = arith.constant 0 : index
    %c0_2 = arith.constant 0 : index
    %c0_3 = arith.constant 0 : index
    %1 = vector.load %arg2[%c0_1, %c0_2, %c0_3] : memref<1x9x64xf32, #tpu.memory_space<vmem>>, vector<1x9x64xf32>
    %2 = vector.shape_cast %1 : vector<1x9x64xf32> to vector<9x64xf32>
    %cst = arith.constant dense<0.000000e+00> : vector<8x64xf32>
    %3 = tpu.matmul %0, %2, %cst {dimension_numbers = #tpu.dot_dimension_numbers<[1], [0], [0], [1], [0, 0, 1, 1], [], []>} : vector<8x9xf32>, vector<9x64xf32>, vector<8x64xf32> -> vector<8x64xf32>
    %c0_4 = arith.constant 0 : index
    %c0_5 = arith.constant 0 : index
    %c0_6 = arith.constant 0 : index
    %4 = vector.load %arg4[%c0_4, %c0_5, %c0_6] : memref<1x8x64xf32, #tpu.memory_space<vmem>>, vector<1x8x64xf32>
    %5 = vector.shape_cast %4 : vector<1x8x64xf32> to vector<8x64xf32>
    %6 = vector.shape_cast %3 : vector<8x64xf32> to vector<1x8x64xf32>
    tpu.vector_store %arg4[%c0_4, %c0_5, %c0_6], %6 {strides = array<i32>} : memref<1x8x64xf32, #tpu.memory_space<vmem>>, vector<1x8x64xf32>,
    return
  }
  func.func @transform_0(%arg0: i32, %arg1: i32) -> (i32, i32, i32) {
    %c0_i32 = arith.constant 0 : i32
    %c0_i32_0 = arith.constant 0 : i32
    return %arg0, %c0_i32, %arg1 : i32, i32, i32
  }
  func.func @transform_1(%arg0: i32, %arg1: i32) -> (i32, i32) {
    %c0_i32 = arith.constant 0 : i32
    %c0_i32_0 = arith.constant 0 : i32
    %c0_i32_1 = arith.constant 0 : i32
    return %c0_i32, %c0_i32_0 : i32, i32
  }
  func.func @transform_2(%arg0: i32, %arg1: i32) -> (i32, i32, i32) {
    %c0_i32 = arith.constant 0 : i32
    %c0_i32_0 = arith.constant 0 : i32
    return %arg0, %c0_i32, %arg1 : i32, i32, i32
  }
}

</mosaic_0001>

<llo_original>
// kernel: factorized_reduce_forward.1
$region0: #{factorized_reduce_forward.1}
  #allocation0 [shape = 'u32[]', space=smem, size = 0x4, offset = 0x4, fixed_abs, tag = 'smem constant byte address 0x4 - core index']
  #allocation1 [shape = 'u32[144,128]{1,0:T(1,128)}', space=vmem, size = 0x12000, scoped, tag = 'internal scratch']
  %s0 = inlined_call_operand.vmem [shape: f32[2,9,64], index: 0, kind: input, shape index: {}]
  %s1 = inlined_call_operand.vmem [shape: f32[8,9], index: 1, kind: input, shape index: {}]
  %s2 = inlined_call_operand.vmem [shape: f32[2,8,64], index: 2, kind: output, shape index: {}]
  %s3 = sld [smem:[#allocation0]]
  $region41: #{factorized_reduce_forward.1} parent=0
    _
  %s5 = ssub.s32 1, %s3
  %s6 = scalar_select 0, %s5, %s3
  loop: start=0, step=1, limit=4
  $region2: #{factorized_reduce_forward.1} parent=0 // loop_pre_header
    _
  $region3: #{factorized_reduce_forward.1} parent=0 // loop_header
    %s8 = sphi 0, %s12
    %p9 = scmp.ge.s32.totalorder %s8, 4
    %s15 = sphi 0, %s27
    %s16 = sphi 0, %s23
    %s17 = sphi 0, %s15
    %s18 = sphi 0, %s16
    %s19 = sphi 0, %s17
    %s20 = sphi 0, %s18
    %s32 = sphi 0, %s34
    %s35 = sphi 0, %s32
    %s36 = sphi 0, %s35
    %s52 = sphi 0, %s36
    %s56 = sphi 0, %s56
    %s58 = sphi 0, %s56
    %s59 = sphi 0, %s58
    %s73 = sphi 0, %s59
    %s81 = sphi 0, %s83
    %s84 = sphi 0, %s81
    %s85 = sphi 0, %s84
    %s101 = sphi 0, %s85
  $region4: #{factorized_reduce_forward.1} parent=0 // loop_header_branch
    %11 = sbr.rel (%p9) target = $region8
  $region5: #{factorized_reduce_forward.1} parent=0 // loop_body
    %s13 = ssub.s32 %s8, 1
    %s14 = ssub.s32 %s8, 2
    %s21 = sadd.s32 1, %s16
    %p22 = scmp.ge.s32.totalorder %s21, 1
    %s23 = scalar_select %p22, 0, %s21
    %s24 = sadd.s32 1, %s15
    %s25 = scalar_select %p22, %s24, %s15
    %p26 = scmp.ge.s32.totalorder %s25, 2
    %s27 = scalar_select %p26, 0, %s25
    %s28 = ssub.s32 %s15, %s27
    %s29 = ssub.s32 %s16, %s23
    %s30 = sor.u32 %s28, %s29
    %p31 = scmp.eq.s32.totalorder %s30, 0
    %s33 = sadd.s32 %s32, 1
    %s34 = scalar_select %p31, %s32, %s33
    %p37 = pneg %p31
    %p38 = scmp.eq.s32.totalorder %s8, 1
    %p39 = por %p37, %p38
    %p40 = scmp.ne.s32.totalorder %s32, %s35
    %p41 = scmp.eq.s32.totalorder %s8, 0
    %p42 = por %p40, %p41
    %p43 = scmp.ne.s32.totalorder %s32, %s35
    %p44 = scmp.eq.s32.totalorder %s13, 1
    %p45 = por %p43, %p44
    %p46 = scmp.ne.s32.totalorder %s35, %s36
    %p47 = scmp.eq.s32.totalorder %s13, 0
    %p48 = por %p46, %p47
    %p49 = scmp.ne.s32.totalorder %s35, %s36
    %p50 = scmp.eq.s32.totalorder %s14, 1
    %p51 = por %p49, %p50
    %p53 = scmp.ne.s32.totalorder %s36, %s52
    %p54 = scmp.eq.s32.totalorder %s14, 0
    %p55 = por %p53, %p54
    %s57 = sadd.s32 %s56, 1
    %p60 = scmp.eq.s32.totalorder %s8, 1
    %p61 = scmp.ne.s32.totalorder %s56, %s58
    %p62 = scmp.eq.s32.totalorder %s8, 0
    %p63 = por %p61, %p62
    %p64 = scmp.ne.s32.totalorder %s56, %s58
    %p65 = scmp.eq.s32.totalorder %s13, 1
    %p66 = por %p64, %p65
    %p67 = scmp.ne.s32.totalorder %s58, %s59
    %p68 = scmp.eq.s32.totalorder %s13, 0
    %p69 = por %p67, %p68
    %p70 = scmp.ne.s32.totalorder %s58, %s59
    %p71 = scmp.eq.s32.totalorder %s14, 1
    %p72 = por %p70, %p71
    %p74 = scmp.ne.s32.totalorder %s59, %s73
    %p75 = scmp.eq.s32.totalorder %s14, 0
    %p76 = por %p74, %p75
    %s77 = ssub.s32 %s15, %s27
    %s78 = ssub.s32 %s16, %s23
    %s79 = sor.u32 %s77, %s78
    %p80 = scmp.eq.s32.totalorder %s79, 0
    %s82 = sadd.s32 %s81, 1
    %s83 = scalar_select %p80, %s81, %s82
    %p86 = pneg %p80
    %p87 = scmp.eq.s32.totalorder %s8, 1
    %p88 = por %p86, %p87
    %p89 = scmp.ne.s32.totalorder %s81, %s84
    %p90 = scmp.eq.s32.totalorder %s8, 0
    %p91 = por %p89, %p90
    %p92 = scmp.ne.s32.totalorder %s81, %s84
    %p93 = scmp.eq.s32.totalorder %s13, 1
    %p94 = por %p92, %p93
    %p95 = scmp.ne.s32.totalorder %s84, %s85
    %p96 = scmp.eq.s32.totalorder %s13, 0
    %p97 = por %p95, %p96
    %p98 = scmp.ne.s32.totalorder %s84, %s85
    %p99 = scmp.eq.s32.totalorder %s14, 1
    %p100 = por %p98, %p99
    %p102 = scmp.ne.s32.totalorder %s85, %s101
    %p103 = scmp.eq.s32.totalorder %s14, 0
    %p104 = por %p102, %p103
    %p105 = scmp.le.s32.totalorder 1, %s8
    %p106 = scmp.lt.s32.totalorder %s8, 3
    %p107 = pnand %p105, %p106
    %p108 = pneg %p107
    // Predicated region
    $region9: #{factorized_reduce_forward.1} parent=5 // pred_check
      _
    $region10: #{factorized_reduce_forward.1} parent=5 // pred_check_branch
      %110 = sbr.rel (%p107) target = $region12
    $region11: #{factorized_reduce_forward.1} parent=5 // pred_region
      %s111 = ssub.s32 %s8, 1
      // Predicated region
      $region13: #{factorized_reduce_forward.1} parent=11 // pred_check
        %p112 = pneg %p69
      $region14: #{factorized_reduce_forward.1} parent=11 // pred_check_branch
        %114 = sbr.rel (%p112) target = $region16
      $region15: #{factorized_reduce_forward.1} parent=11 // pred_region
        _
      $region16: #{factorized_reduce_forward.1} parent=11 // pred_fallthru
        _
    $region12: #{factorized_reduce_forward.1} parent=5 // pred_fallthru
      _
    %p115 = scmp.lt.s32.totalorder %s8, 2
    // Predicated region
    $region17: #{factorized_reduce_forward.1} parent=5 // pred_check
      %p116 = pneg %p115
    $region18: #{factorized_reduce_forward.1} parent=5 // pred_check_branch
      %118 = sbr.rel (%p116) target = $region20
    $region19: #{factorized_reduce_forward.1} parent=5 // pred_region
      // Predicated region
      $region21: #{factorized_reduce_forward.1} parent=19 // pred_check
        %p119 = pneg %p42
      $region22: #{factorized_reduce_forward.1} parent=19 // pred_check_branch
        %121 = sbr.rel (%p119) target = $region24
      $region23: #{factorized_reduce_forward.1} parent=19 // pred_region
        %p122 = scmp.lt.s32.totalorder %s15, 1
        %s123 = scalar_select %p122, %s15, 1
        %p124 = scmp.lt.s32.totalorder %s16, 0
        %s125 = scalar_select %p124, %s16, 0
        %s126 = smul.addr %s123, 2
        %s127 = sadd.s32 %s125, %s126
        %s128 = smul.addr %s127, 8
        %s129 = scalar_lea.vmem %s0, %s128
      $region24: #{factorized_reduce_forward.1} parent=19 // pred_fallthru
        _
    $region20: #{factorized_reduce_forward.1} parent=5 // pred_fallthru
      _
    %p130 = scmp.le.s32.totalorder 1, %s8
    %p131 = scmp.lt.s32.totalorder %s8, 3
    %p132 = pnand %p130, %p131
    %p133 = pneg %p132
    // Predicated region
    $region25: #{factorized_reduce_forward.1} parent=5 // pred_check
      _
    $region26: #{factorized_reduce_forward.1} parent=5 // pred_check_branch
      %135 = sbr.rel (%p132) target = $region28
    $region27: #{factorized_reduce_forward.1} parent=5 // pred_region
      %s136 = ssub.s32 %s8, 1
      %p137 = scmp.lt.s32.totalorder %s17, 1
      %s138 = scalar_select %p137, %s17, 1
      %p139 = scmp.lt.s32.totalorder %s18, 0
      %s140 = scalar_select %p139, %s18, 0
      %s141 = smul.addr %s138, 2
      %s142 = sadd.s32 %s140, %s141
      %s143 = smul.addr %s142, 8
      %s144 = scalar_lea.vmem %s0, %s143
      %p145 = pneg %p48
      %p146 = pneg %p45
      %p147 = pneg %p69
      %p148 = pneg %p66
      %p149 = pneg %p97
      %p150 = pneg %p94
      %p151 = scmp.lt.s32.totalorder %s17, 1
      %s152 = scalar_select %p151, %s17, 1
      %p153 = scmp.lt.s32.totalorder %s18, 0
      %s154 = scalar_select %p153, %s18, 0
      %s155 = sadd.s32 %s154, %s152
      %s156 = smul.addr %s155, 8
      %s157 = scalar_lea.vmem %s2, %s156
      %p158 = scmp.lt.s32.totalorder %s17, 1
      %s159 = scalar_select %p158, %s17, 1
      %p160 = scmp.lt.s32.totalorder %s18, 0
      %s161 = scalar_select %p160, %s18, 0
      %s162 = smul.addr %s159, 2
      %s163 = sadd.s32 %s161, %s162
      %s164 = smul.addr %s163, 8
      %s165 = scalar_lea.vmem %s0, %s164
      %p166 = scmp.lt.s32.totalorder %s17, 1
      %s167 = scalar_select %p166, %s17, 1
      %p168 = scmp.lt.s32.totalorder %s18, 0
      %s169 = scalar_select %p168, %s18, 0
      %s170 = sadd.s32 %s169, %s167
      %s171 = smul.addr %s170, 8
      %s172 = scalar_lea.vmem %s2, %s171
      %v173 = vld [vmem:[%s1] sm:$0xff]
      %v174 = vld [vmem:[%s165] sm:$0xff]
      %v175 = vld [vmem:[%s165 + $0x8] sm:$0x1]
      %vm176 = vcmask 72704
      %v178 = vsel %vm176, %v173, 0
      %vm180 = vcmask 1040384
      %v182 = vsel %vm180, %v175, 0
      %184 = vmatprep.subr.mxu0 0.0
      %185 = vmatpush1.msra.mxu0 0.0
      %186 = vmatprep.subr.mxu0 0.0
      %187 = vmatpush1.msra.mxu0 0.0
      %188 = vmatprep.subr.mxu0 0.0
      %189 = vmatpush1.msra.mxu0 0.0
      %190 = vmatprep.subr.mxu0 0.0
      %191 = vmatpush1.msra.mxu0 0.0
      %192 = vmatprep.subr.mxu0 0.0
      %193 = vmatpush1.msra.mxu0 0.0
      %194 = vmatprep.subr.mxu0 0.0
      %195 = vmatpush1.msra.mxu0 0.0
      %196 = vmatprep.subr.mxu0 0.0
      %197 = vmatpush1.msra.mxu0 0.0
      %198 = vmatprep.subr.mxu0 0.0
      %199 = vmatpush1.msra.mxu0 0.0
      %200 = vmatprep.subr.mxu0 0.0
      %201 = vmatpush1.msra.mxu0 0.0
      %202 = vmatprep.subr.mxu0 0.0
      %203 = vmatpush1.msra.mxu0 0.0
      %204 = vmatprep.subr.mxu0 0.0
      %205 = vmatpush1.msra.mxu0 0.0
      %206 = vmatprep.subr.mxu0 0.0
      %207 = vmatpush1.msra.mxu0 0.0
      %208 = vmatprep.subr.mxu0 0.0
      %209 = vmatpush1.msra.mxu0 0.0
      %210 = vmatprep.subr.mxu0 0.0
      %211 = vmatpush1.msra.mxu0 0.0
      %212 = vmatprep.subr.mxu0 0.0
      %213 = vmatpush1.msra.mxu0 %v182
      %214 = vmatprep.subr.mxu0 0.0
      %215 = vmatpush1.msra.mxu0 %v174
      %216 = vmatprep.subr.mxu0 0.0
      %217 = vmatpush2.msra.mxu0 0.0
      %218 = vmatprep.subr.mxu0 0.0
      %219 = vmatpush2.msra.mxu0 0.0
      %220 = vmatprep.subr.mxu0 0.0
      %221 = vmatpush2.msra.mxu0 0.0
      %222 = vmatprep.subr.mxu0 0.0
      %223 = vmatpush2.msra.mxu0 0.0
      %224 = vmatprep.subr.mxu0 0.0
      %225 = vmatpush2.msra.mxu0 0.0
      %226 = vmatprep.subr.mxu0 0.0
      %227 = vmatpush2.msra.mxu0 0.0
      %228 = vmatprep.subr.mxu0 0.0
      %229 = vmatpush2.msra.mxu0 0.0
      %230 = vmatprep.subr.mxu0 0.0
      %231 = vmatpush2.msra.mxu0 0.0
      %232 = vmatprep.subr.mxu0 0.0
      %233 = vmatpush2.msra.mxu0 0.0
      %234 = vmatprep.subr.mxu0 0.0
      %235 = vmatpush2.msra.mxu0 0.0
      %236 = vmatprep.subr.mxu0 0.0
      %237 = vmatpush2.msra.mxu0 0.0
      %238 = vmatprep.subr.mxu0 0.0
      %239 = vmatpush2.msra.mxu0 0.0
      %240 = vmatprep.subr.mxu0 0.0
      %241 = vmatpush2.msra.mxu0 0.0
      %242 = vmatprep.subr.mxu0 0.0
      %243 = vmatpush2.msra.mxu0 0.0
      %244 = vmatprep.subr.mxu0 0.0
      %245 = vmatpush2.msra.mxu0 0.0
      %246 = vmatprep.subr.mxu0 0.0
      %247 = vmatpush2.msra.mxu0 0.0
      %248 = vmatprep.mubr.f32.mxu0 0.0
      %249 = vmatmul.mubr.f32.gmra.mxu0 %v178
      %v250 = vpop.f32.mrf.mxu0
      %v251 = vadd.f32 0.0, %v250
      %v252 = vpop.f32.mrf.mxu0
      %253 = vdwg.mxu0
      %vm254 = vcmask 523264
      %255 = vst.msk [vmem:[%s172] sm:$0xff] %vm254, %v251
      %p256 = scmp.lt.s32.totalorder %s17, 1
      %s257 = scalar_select %p256, %s17, 1
      %p258 = scmp.lt.s32.totalorder %s18, 0
      %s259 = scalar_select %p258, %s18, 0
      %s260 = sadd.s32 %s259, %s257
      %s261 = smul.addr %s260, 8
      %s262 = scalar_lea.vmem %s2, %s261
      // Predicated region
      $region29: #{factorized_reduce_forward.1} parent=27 // pred_check
        %p263 = pneg %p94
      $region30: #{factorized_reduce_forward.1} parent=27 // pred_check_branch
        %265 = sbr.rel (%p263) target = $region32
      $region31: #{factorized_reduce_forward.1} parent=27 // pred_region
        _
      $region32: #{factorized_reduce_forward.1} parent=27 // pred_fallthru
        _
    $region28: #{factorized_reduce_forward.1} parent=5 // pred_fallthru
      _
    %p266 = scmp.le.s32.totalorder 2, %s8
    // Predicated region
    $region33: #{factorized_reduce_forward.1} parent=5 // pred_check
      %p267 = pneg %p266
    $region34: #{factorized_reduce_forward.1} parent=5 // pred_check_branch
      %269 = sbr.rel (%p267) target = $region36
    $region35: #{factorized_reduce_forward.1} parent=5 // pred_region
      %s270 = ssub.s32 %s8, 2
      // Predicated region
      $region37: #{factorized_reduce_forward.1} parent=35 // pred_check
        %p271 = pneg %p100
      $region38: #{factorized_reduce_forward.1} parent=35 // pred_check_branch
        %273 = sbr.rel (%p271) target = $region40
      $region39: #{factorized_reduce_forward.1} parent=35 // pred_region
        %p274 = scmp.lt.s32.totalorder %s19, 1
        %s275 = scalar_select %p274, %s19, 1
        %p276 = scmp.lt.s32.totalorder %s20, 0
        %s277 = scalar_select %p276, %s20, 0
        %s278 = sadd.s32 %s277, %s275
        %s279 = smul.addr %s278, 8
        %s280 = scalar_lea.vmem %s2, %s279
      $region40: #{factorized_reduce_forward.1} parent=35 // pred_fallthru
        _
    $region36: #{factorized_reduce_forward.1} parent=5 // pred_fallthru
      _
  $region6: #{factorized_reduce_forward.1} parent=0 // loop_footer
    %s12 = sadd.s32 1, %s8
  $region7: #{factorized_reduce_forward.1} parent=0 // loop_footer_branch
    %7 = sbr.rel target = $region3
  $region8: #{factorized_reduce_forward.1} parent=0 // loop_exit
    _

</llo_original>
